<compile_context>
chip_gen: v7x
topology: tpu7x:2x2x1
jax: 0.10.0
libtpu: 0.0.40
codegen_flags: <defaults>
</compile_context>

<pallas_src>
import jax
import jax.numpy as jnp
from jax import lax
from jax.experimental import pallas as pl
from jax.experimental.pallas import tpu as pltpu


def _round_up(x, m):
    return ((x + m - 1) // m) * m


def _cdiv(a, b):
    return (a + b - 1) // b


def _onehot_gather_kernel(idx_ref, re_ref, im_ref, re_out_ref, im_out_ref):
    """One grid step: gather `tn` rows of both tables via a one-hot matmul.

    idx_ref    : VMEM (tn, 1)  int32   -- row ids for this output tile
    re_ref     : VMEM (E, R)   float32 -- fully resident real table
    im_ref     : VMEM (E, R)   float32 -- fully resident imag table
    re_out_ref : VMEM (tn, R)  float32
    im_out_ref : VMEM (tn, R)  float32
    """
    tn = idx_ref.shape[0]
    embed_num = re_ref.shape[0]

    idx = idx_ref[...]                                            # (tn, 1)
    row_ids = lax.broadcasted_iota(jnp.int32, (tn, embed_num), 1)
    # Out-of-range indices (incl. the padded tail) match no row -> zero output
    # rows.  (torch.index_select would raise; there is no cheap in-kernel
    # error path, so OOB degrades to "safe zeros" instead of an unchecked
    # VMEM access.)
    onehot = (idx == row_ids).astype(jnp.float32)                 # (tn, E)

    # Exact gather: 0/1 weights through the (>= bf16x3) f32 MXU path.
    re_out_ref[...] = jnp.dot(
        onehot, re_ref[...], preferred_element_type=jnp.float32
    ).astype(re_out_ref.dtype)
    im_out_ref[...] = jnp.dot(
        onehot, im_ref[...], preferred_element_type=jnp.float32
    ).astype(im_out_ref.dtype)


def sparse_embedding_forward(indices, dense_re, dense_im, *, block_rows=512):
    """Pallas equivalent of SparseEmbedding.forward.

    indices:  int (N,)
    dense_re: float (embed_num, rank)
    dense_im: float (embed_num, rank)
    returns (re_feats, im_feats), each float32 (N, rank)
    """
    assert indices.ndim == 1, "Input tensor must be one dimension."
    n = indices.shape[0]
    embed_num, rank = dense_re.shape
    assert dense_im.shape == (embed_num, rank)

    # ---- output tile height ------------------------------------------------
    tn = min(block_rows, _round_up(n, 8))
    if tn >= n and n > 8:
        # Split into >= 2 grid steps so "parallel" can shard across both v7x
        # TensorCores (no effect on single-TC v5e/v6e).
        tn = _round_up(_cdiv(n, 2), 8)
    n_pad = _round_up(n, tn)
    grid = (n_pad // tn,)

    # Indices as a sublane-oriented (n_pad, 1) int32 column; padded tail rows
    # use index `embed_num` (out of range -> zero rows, sliced off below).
    idx = indices.astype(jnp.int32).reshape(n, 1)
    if n_pad != n:
        idx = jnp.pad(idx, ((0, n_pad - n), (0, 0)), constant_values=embed_num)

    dense_re = dense_re.astype(jnp.float32)
    dense_im = dense_im.astype(jnp.float32)

    # ---- explicit VMEM budget ----------------------------------------------
    table_bytes = 2 * embed_num * rank * 4          # both tables
    tile_bytes = tn * (2 * rank + 1) * 4            # out tiles + idx tile
    vmem_limit = int(min(max(2 * table_bytes + 8 * tile_bytes + (2 << 20),
                             16 << 20), 48 << 20))
    # TODO(synk): mark the two table BlockSpecs pipeline_mode=pl.Buffered(1)
    # (constant index_map -> single-buffering halves their VMEM footprint),
    # and for tables whose footprint exceeds ~40 MiB on v7x (~100 MiB on
    # v5e/v6e with the limit raised) switch to a DMA row-gather: table at
    # memory_space=pl.ANY (HBM), scalar-prefetched indices, batched
    # pltpu.make_async_copy with 4-8 DMAs in flight.

    flops = 2 * (2 * n_pad * embed_num * rank)       # two (tn,E)x(E,R) matmuls
    bytes_accessed = table_bytes + n_pad * (2 * rank + 1) * 4

    out_shape = (
        jax.ShapeDtypeStruct((n_pad, rank), jnp.float32),
        jax.ShapeDtypeStruct((n_pad, rank), jnp.float32),
    )

    re_pad, im_pad = pl.pallas_call(
        _onehot_gather_kernel,
        grid=grid,
        in_specs=[
            pl.BlockSpec((tn, 1), lambda i: (i, 0)),
            # Whole tables resident in VMEM (block == full array dims, so no
            # (8,128) divisibility requirement and no padding pass in HBM).
            pl.BlockSpec((embed_num, rank), lambda i: (0, 0)),
            pl.BlockSpec((embed_num, rank), lambda i: (0, 0)),
        ],
        out_specs=(
            pl.BlockSpec((tn, rank), lambda i: (i, 0)),
            pl.BlockSpec((tn, rank), lambda i: (i, 0)),
        ),
        out_shape=out_shape,
        compiler_params=pltpu.CompilerParams(
            dimension_semantics=("parallel",),
            vmem_limit_bytes=vmem_limit,
        ),
        cost_estimate=pl.CostEstimate(
            flops=flops, transcendentals=0, bytes_accessed=bytes_accessed),
    )(idx, dense_re, dense_im)

    return re_pad[:n], im_pad[:n]


def densify_coo(index, value, shape):
    """COO (2, nnz) indices + (nnz,) values -> dense array; duplicates summed
    (matches torch.sparse_coo_tensor(...).to_dense())."""
    rows, cols = index[0], index[1]
    dense = jnp.zeros(shape, dtype=value.dtype)
    return dense.at[rows, cols].add(value)


if __name__ == "__main__":
    key = jax.random.PRNGKey(0)
    k1, k2, k3, k4, k5 = jax.random.split(key, 5)

    embed_num = 64   # "size"
    rank = 32        # "rank" (re_size == im_size == rank)
    nnz = 128        # stored sparse entries
    n_query = 24     # length of the 1-D input index tensor (2 grid steps)

    # Deterministic synthetic sparse COO parameters.
    re_rows = jax.random.randint(k1, (nnz,), 0, embed_num)
    re_cols = jax.random.randint(k2, (nnz,), 0, rank)
    re_index = jnp.stack([re_rows, re_cols], axis=0)
    re_value = jax.random.normal(k1, (nnz,), dtype=jnp.float32)

    im_rows = jax.random.randint(k3, (nnz,), 0, embed_num)
    im_cols = jax.random.randint(k4, (nnz,), 0, rank)
    im_index = jnp.stack([im_rows, im_cols], axis=0)
    im_value = jax.random.normal(k3, (nnz,), dtype=jnp.float32)

    # get_whole_embedding(): densify once (glue, plain JAX).
    dense_re = densify_coo(re_index, re_value, (embed_num, rank))
    dense_im = densify_coo(im_index, im_value, (embed_num, rank))

    # 1-D query index tensor.
    query = jax.random.randint(k5, (n_query,), 0, embed_num, dtype=jnp.int32)

    re_feats, im_feats = sparse_embedding_forward(query, dense_re, dense_im)
    jax.block_until_ready((re_feats, im_feats))

    # Reference check against plain JAX index_select.
    ref_re = jnp.take(dense_re, query, axis=0)
    ref_im = jnp.take(dense_im, query, axis=0)
    assert re_feats.shape == (n_query, rank)
    assert im_feats.shape == (n_query, rank)
    assert jnp.allclose(re_feats, ref_re, atol=1e-6, rtol=1e-6)
    assert jnp.allclose(im_feats, ref_im, atol=1e-6, rtol=1e-6)

    print("KERNEL_OK")
</pallas_src>

<mosaic_0001>
module attributes {stable_mosaic.version = 11 : i64} {
  func.func @_onehot_gather_kernel(%arg0: i32, %arg1: memref<16x1xi32, #tpu.memory_space<vmem>>, %arg2: memref<64x32xf32, #tpu.memory_space<vmem>>, %arg3: memref<64x32xf32, #tpu.memory_space<vmem>>, %arg4: memref<16x32xf32, #tpu.memory_space<vmem>>, %arg5: memref<16x32xf32, #tpu.memory_space<vmem>>) attributes {dimension_semantics = [#tpu.dimension_semantics<parallel>], iteration_bounds = array<i64: 2>, scalar_prefetch = 0 : i64, scratch_operands = 0 : i64, tpu.core_type = #tpu.core_type<tc>, window_params = [{transform_indices = @transform_0, window_bounds = array<i64: 16, 1>}, {pipeline_mode = #tpu.pipeline_mode<synchronous>, transform_indices = @transform_1, window_bounds = array<i64: 64, 32>}, {pipeline_mode = #tpu.pipeline_mode<synchronous>, transform_indices = @transform_2, window_bounds = array<i64: 64, 32>}, {transform_indices = @transform_3, window_bounds = array<i64: 16, 32>}, {transform_indices = @transform_4, window_bounds = array<i64: 16, 32>}]} {
    %c0 = arith.constant 0 : index
    %c0_0 = arith.constant 0 : index
    %0 = vector.load %arg1[%c0, %c0_0] : memref<16x1xi32, #tpu.memory_space<vmem>>, vector<16x1xi32>
    %1 = tpu.iota {dimensions = array<i32: 1>} : vector<16x64xi32>
    %2 = vector.broadcast %0 : vector<16x1xi32> to vector<16x64xi32>
    %3 = arith.cmpi eq, %2, %1 : vector<16x64xi32>
    %4 = arith.extui %3 : vector<16x64xi1> to vector<16x64xi32>
    %5 = arith.sitofp %4 : vector<16x64xi32> to vector<16x64xf32>
    %c0_1 = arith.constant 0 : index
    %c0_2 = arith.constant 0 : index
    %6 = vector.load %arg2[%c0_1, %c0_2] : memref<64x32xf32, #tpu.memory_space<vmem>>, vector<64x32xf32>
    %cst = arith.constant dense<0.000000e+00> : vector<16x32xf32>
    %7 = tpu.matmul %5, %6, %cst {dimension_numbers = #tpu.dot_dimension_numbers<[1], [0], [0], [1], [0, 0, 1, 1], [], []>} : vector<16x64xf32>, vector<64x32xf32>, vector<16x32xf32> -> vector<16x32xf32>
    %c0_3 = arith.constant 0 : index
    %c0_4 = arith.constant 0 : index
    %8 = vector.load %arg4[%c0_3, %c0_4] : memref<16x32xf32, #tpu.memory_space<vmem>>, vector<16x32xf32>
    tpu.vector_store %arg4[%c0_3, %c0_4], %7 {strides = array<i32>} : memref<16x32xf32, #tpu.memory_space<vmem>>, vector<16x32xf32>,
    %c0_5 = arith.constant 0 : index
    %c0_6 = arith.constant 0 : index
    %9 = vector.load %arg3[%c0_5, %c0_6] : memref<64x32xf32, #tpu.memory_space<vmem>>, vector<64x32xf32>
    %cst_7 = arith.constant dense<0.000000e+00> : vector<16x32xf32>
    %10 = tpu.matmul %5, %9, %cst_7 {dimension_numbers = #tpu.dot_dimension_numbers<[1], [0], [0], [1], [0, 0, 1, 1], [], []>} : vector<16x64xf32>, vector<64x32xf32>, vector<16x32xf32> -> vector<16x32xf32>
    %c0_8 = arith.constant 0 : index
    %c0_9 = arith.constant 0 : index
    %11 = vector.load %arg5[%c0_8, %c0_9] : memref<16x32xf32, #tpu.memory_space<vmem>>, vector<16x32xf32>
    tpu.vector_store %arg5[%c0_8, %c0_9], %10 {strides = array<i32>} : memref<16x32xf32, #tpu.memory_space<vmem>>, vector<16x32xf32>,
    return
  }
  func.func @transform_0(%arg0: i32) -> (i32, i32) {
    %c0_i32 = arith.constant 0 : i32
    %c0_i32_0 = arith.constant 0 : i32
    return %arg0, %c0_i32 : i32, i32
  }
  func.func @transform_1(%arg0: i32) -> (i32, i32) {
    %c0_i32 = arith.constant 0 : i32
    %c0_i32_0 = arith.constant 0 : i32
    %c0_i32_1 = arith.constant 0 : i32
    return %c0_i32, %c0_i32_0 : i32, i32
  }
  func.func @transform_2(%arg0: i32) -> (i32, i32) {
    %c0_i32 = arith.constant 0 : i32
    %c0_i32_0 = arith.constant 0 : i32
    %c0_i32_1 = arith.constant 0 : i32
    return %c0_i32, %c0_i32_0 : i32, i32
  }
  func.func @transform_3(%arg0: i32) -> (i32, i32) {
    %c0_i32 = arith.constant 0 : i32
    %c0_i32_0 = arith.constant 0 : i32
    return %arg0, %c0_i32 : i32, i32
  }
  func.func @transform_4(%arg0: i32) -> (i32, i32) {
    %c0_i32 = arith.constant 0 : i32
    %c0_i32_0 = arith.constant 0 : i32
    return %arg0, %c0_i32 : i32, i32
  }
}

</mosaic_0001>

<llo_original>
// kernel: tpu_custom_call.1
$region0: #{tpu_custom_call.1}
  #allocation0 [shape = 'u32[]', space=smem, size = 0x4, offset = 0x4, fixed_abs, tag = 'smem constant byte address 0x4 - core index']
  #allocation1 [shape = 'u32[144,128]{1,0:T(1,128)}', space=vmem, size = 0x12000, scoped, tag = 'internal scratch']
  %s0 = inlined_call_operand.vmem [shape: s32[32,1], index: 0, kind: input, shape index: {}]
  %s1 = inlined_call_operand.vmem [shape: f32[64,32], index: 1, kind: input, shape index: {}]
  %s2 = inlined_call_operand.vmem [shape: f32[64,32], index: 2, kind: input, shape index: {}]
  %s3 = inlined_call_operand.hbm [shape: f32[32,32], index: 3, kind: output, shape index: {0}]
  %s4 = inlined_call_operand.hbm [shape: f32[32,32], index: 4, kind: output, shape index: {1}]
  %5 = xla_tuple %s3, %s4
  %s6 = sld [smem:[#allocation0]]
  $region53: #{tpu_custom_call.1} parent=0
    _
  %s8 = ssub.s32 1, %s6
  %s9 = scalar_select 0, %s8, %s6
  $region1: #{tpu_custom_call.1} parent=0
    #allocation2 [shape = 'u8[16384]{0}', space=vmem, size = 0x4000, scoped, tag = 'output window, operand 0']
    #allocation3 [shape = 's32[2]{0}', space=sflag, size = 0x8, scoped, tag = 'scoped memory for tpu_custom_call.1']
    #allocation4 [shape = 'u8[16384]{0}', space=vmem, size = 0x4000, scoped, tag = 'output window, operand 1']
    #allocation5 [shape = 's32[2]{0}', space=sflag, size = 0x8, scoped, tag = 'scoped memory for tpu_custom_call.1']
    %10 = vsyncpa [#allocation3], 0
    %s11 = scalar_lea.sflag [#allocation3], 1
    %12 = vsyncpa %s11, 0
    %13 = vsyncpa [#allocation5], 0
    %s14 = scalar_lea.sflag [#allocation5], 1
    %15 = vsyncpa %s14, 0
    loop: start=0, step=1, limit=4
    $region2: #{tpu_custom_call.1} parent=1 // loop_pre_header
      _
    $region3: #{tpu_custom_call.1} parent=1 // loop_header
      %s17 = sphi 0, %s21
      %p18 = scmp.ge.s32.totalorder %s17, 4
      %s27 = sphi 0, %s29
      %s30 = sphi 0, %s27
      %s31 = sphi 0, %s30
      %s47 = sphi 0, %s31
      %s51 = sphi 0, %s51
      %s53 = sphi 0, %s51
      %s54 = sphi 0, %s53
      %s68 = sphi 0, %s54
      %s72 = sphi 0, %s72
      %s74 = sphi 0, %s72
      %s75 = sphi 0, %s74
      %s89 = sphi 0, %s75
      %s95 = sphi 0, %s97
      %s98 = sphi 0, %s95
      %s99 = sphi 0, %s98
      %s115 = sphi 0, %s99
      %s121 = sphi 0, %s123
      %s124 = sphi 0, %s121
      %s125 = sphi 0, %s124
      %s141 = sphi 0, %s125
    $region4: #{tpu_custom_call.1} parent=1 // loop_header_branch
      %20 = sbr.rel (%p18) target = $region8
    $region5: #{tpu_custom_call.1} parent=1 // loop_body
      %s22 = ssub.s32 %s17, 1
      %s23 = ssub.s32 %s17, 2
      %s24 = sadd.s32 %s17, 1
      %s25 = ssub.s32 %s17, %s24
      %p26 = scmp.eq.s32.totalorder %s25, 0
      %s28 = sadd.s32 %s27, 1
      %s29 = scalar_select %p26, %s27, %s28
      %p32 = pneg %p26
      %p33 = scmp.eq.s32.totalorder %s17, 1
      %p34 = por %p32, %p33
      %p35 = scmp.ne.s32.totalorder %s27, %s30
      %p36 = scmp.eq.s32.totalorder %s17, 0
      %p37 = por %p35, %p36
      %p38 = scmp.ne.s32.totalorder %s27, %s30
      %p39 = scmp.eq.s32.totalorder %s22, 1
      %p40 = por %p38, %p39
      %p41 = scmp.ne.s32.totalorder %s30, %s31
      %p42 = scmp.eq.s32.totalorder %s22, 0
      %p43 = por %p41, %p42
      %p44 = scmp.ne.s32.totalorder %s30, %s31
      %p45 = scmp.eq.s32.totalorder %s23, 1
      %p46 = por %p44, %p45
      %p48 = scmp.ne.s32.totalorder %s31, %s47
      %p49 = scmp.eq.s32.totalorder %s23, 0
      %p50 = por %p48, %p49
      %s52 = sadd.s32 %s51, 1
      %p55 = scmp.eq.s32.totalorder %s17, 1
      %p56 = scmp.ne.s32.totalorder %s51, %s53
      %p57 = scmp.eq.s32.totalorder %s17, 0
      %p58 = por %p56, %p57
      %p59 = scmp.ne.s32.totalorder %s51, %s53
      %p60 = scmp.eq.s32.totalorder %s22, 1
      %p61 = por %p59, %p60
      %p62 = scmp.ne.s32.totalorder %s53, %s54
      %p63 = scmp.eq.s32.totalorder %s22, 0
      %p64 = por %p62, %p63
      %p65 = scmp.ne.s32.totalorder %s53, %s54
      %p66 = scmp.eq.s32.totalorder %s23, 1
      %p67 = por %p65, %p66
      %p69 = scmp.ne.s32.totalorder %s54, %s68
      %p70 = scmp.eq.s32.totalorder %s23, 0
      %p71 = por %p69, %p70
      %s73 = sadd.s32 %s72, 1
      %p76 = scmp.eq.s32.totalorder %s17, 1
      %p77 = scmp.ne.s32.totalorder %s72, %s74
      %p78 = scmp.eq.s32.totalorder %s17, 0
      %p79 = por %p77, %p78
      %p80 = scmp.ne.s32.totalorder %s72, %s74
      %p81 = scmp.eq.s32.totalorder %s22, 1
      %p82 = por %p80, %p81
      %p83 = scmp.ne.s32.totalorder %s74, %s75
      %p84 = scmp.eq.s32.totalorder %s22, 0
      %p85 = por %p83, %p84
      %p86 = scmp.ne.s32.totalorder %s74, %s75
      %p87 = scmp.eq.s32.totalorder %s23, 1
      %p88 = por %p86, %p87
      %p90 = scmp.ne.s32.totalorder %s75, %s89
      %p91 = scmp.eq.s32.totalorder %s23, 0
      %p92 = por %p90, %p91
      %s93 = ssub.s32 %s17, %s24
      %p94 = scmp.eq.s32.totalorder %s93, 0
      %s96 = sadd.s32 %s95, 1
      %s97 = scalar_select %p94, %s95, %s96
      %p100 = pneg %p94
      %p101 = scmp.eq.s32.totalorder %s17, 1
      %p102 = por %p100, %p101
      %p103 = scmp.ne.s32.totalorder %s95, %s98
      %p104 = scmp.eq.s32.totalorder %s17, 0
      %p105 = por %p103, %p104
      %p106 = scmp.ne.s32.totalorder %s95, %s98
      %p107 = scmp.eq.s32.totalorder %s22, 1
      %p108 = por %p106, %p107
      %p109 = scmp.ne.s32.totalorder %s98, %s99
      %p110 = scmp.eq.s32.totalorder %s22, 0
      %p111 = por %p109, %p110
      %p112 = scmp.ne.s32.totalorder %s98, %s99
      %p113 = scmp.eq.s32.totalorder %s23, 1
      %p114 = por %p112, %p113
      %p116 = scmp.ne.s32.totalorder %s99, %s115
      %p117 = scmp.eq.s32.totalorder %s23, 0
      %p118 = por %p116, %p117
      %s119 = ssub.s32 %s17, %s24
      %p120 = scmp.eq.s32.totalorder %s119, 0
      %s122 = sadd.s32 %s121, 1
      %s123 = scalar_select %p120, %s121, %s122
      %p126 = pneg %p120
      %p127 = scmp.eq.s32.totalorder %s17, 1
      %p128 = por %p126, %p127
      %p129 = scmp.ne.s32.totalorder %s121, %s124
      %p130 = scmp.eq.s32.totalorder %s17, 0
      %p131 = por %p129, %p130
      %p132 = scmp.ne.s32.totalorder %s121, %s124
      %p133 = scmp.eq.s32.totalorder %s22, 1
      %p134 = por %p132, %p133
      %p135 = scmp.ne.s32.totalorder %s124, %s125
      %p136 = scmp.eq.s32.totalorder %s22, 0
      %p137 = por %p135, %p136
      %p138 = scmp.ne.s32.totalorder %s124, %s125
      %p139 = scmp.eq.s32.totalorder %s23, 1
      %p140 = por %p138, %p139
      %p142 = scmp.ne.s32.totalorder %s125, %s141
      %p143 = scmp.eq.s32.totalorder %s23, 0
      %p144 = por %p142, %p143
      %p145 = scmp.le.s32.totalorder 1, %s17
      %p146 = scmp.lt.s32.totalorder %s17, 3
      %p147 = pnand %p145, %p146
      %p148 = pneg %p147
      // Predicated region
      $region9: #{tpu_custom_call.1} parent=5 // pred_check
        _
      $region10: #{tpu_custom_call.1} parent=5 // pred_check_branch
        %150 = sbr.rel (%p147) target = $region12
      $region11: #{tpu_custom_call.1} parent=5 // pred_region
        %s151 = ssub.s32 %s17, 1
        // Predicated region
        $region13: #{tpu_custom_call.1} parent=11 // pred_check
          %p152 = pneg %p64
        $region14: #{tpu_custom_call.1} parent=11 // pred_check_branch
          %154 = sbr.rel (%p152) target = $region16
        $region15: #{tpu_custom_call.1} parent=11 // pred_region
          _
        $region16: #{tpu_custom_call.1} parent=11 // pred_fallthru
          _
        // Predicated region
        $region17: #{tpu_custom_call.1} parent=11 // pred_check
          %p155 = pneg %p85
        $region18: #{tpu_custom_call.1} parent=11 // pred_check_branch
          %157 = sbr.rel (%p155) target = $region20
        $region19: #{tpu_custom_call.1} parent=11 // pred_region
          _
        $region20: #{tpu_custom_call.1} parent=11 // pred_fallthru
          _
      $region12: #{tpu_custom_call.1} parent=5 // pred_fallthru
        _
      %p158 = scmp.lt.s32.totalorder %s17, 2
      // Predicated region
      $region21: #{tpu_custom_call.1} parent=5 // pred_check
        %p159 = pneg %p158
      $region22: #{tpu_custom_call.1} parent=5 // pred_check_branch
        %161 = sbr.rel (%p159) target = $region24
      $region23: #{tpu_custom_call.1} parent=5 // pred_region
        // Predicated region
        $region25: #{tpu_custom_call.1} parent=23 // pred_check
          %p162 = pneg %p37
        $region26: #{tpu_custom_call.1} parent=23 // pred_check_branch
          %164 = sbr.rel (%p162) target = $region28
        $region27: #{tpu_custom_call.1} parent=23 // pred_region
          %s165 = smul.u32 2, %s17
          %p166 = scmp.lt.s32.totalorder %s165, 3
          %s167 = scalar_select %p166, %s165, 3
          %s168 = smul.addr %s167, 8
          %s169 = scalar_lea.vmem %s0, %s168
          %s170 = smul.u32 2, %s17
        $region28: #{tpu_custom_call.1} parent=23 // pred_fallthru
          _
      $region24: #{tpu_custom_call.1} parent=5 // pred_fallthru
        _
      %p171 = scmp.le.s32.totalorder 1, %s17
      %p172 = scmp.lt.s32.totalorder %s17, 3
      %p173 = pnand %p171, %p172
      %p174 = pneg %p173
      // Predicated region
      $region29: #{tpu_custom_call.1} parent=5 // pred_check
        _
      $region30: #{tpu_custom_call.1} parent=5 // pred_check_branch
        %176 = sbr.rel (%p173) target = $region32
      $region31: #{tpu_custom_call.1} parent=5 // pred_region
        %s177 = ssub.s32 %s17, 1
        %s178 = smul.u32 2, %s22
        %p179 = scmp.lt.s32.totalorder %s178, 3
        %s180 = scalar_select %p179, %s178, 3
        %s181 = smul.addr %s180, 8
        %s182 = scalar_lea.vmem %s0, %s181
        %p183 = pneg %p43
        %p184 = pneg %p40
        %p185 = pneg %p64
        %p186 = pneg %p61
        %p187 = pneg %p85
        %p188 = pneg %p82
        %p189 = pneg %p111
        %p190 = pneg %p108
        %s191 = sand.u32 %s98, 1
        %s192 = scalar_lea.sflag [#allocation3], %s191
        %s193 = sand.u32 %s98, 1
        %s194 = smul.addr %s193, 16
        %s195 = scalar_lea.vmem [#allocation2], %s194
        %p196 = pneg %p137
        %p197 = pneg %p134
        %s198 = sand.u32 %s124, 1
        %s199 = scalar_lea.sflag [#allocation5], %s198
        %s200 = sand.u32 %s124, 1
        %s201 = smul.addr %s200, 16
        %s202 = scalar_lea.vmem [#allocation4], %s201
        %s203 = smul.u32 2, %s22
        %p204 = scmp.lt.s32.totalorder %s203, 3
        %s205 = scalar_select %p204, %s203, 3
        %s206 = smul.addr %s205, 8
        %s207 = scalar_lea.vmem %s0, %s206
        %s208 = smul.u32 2, %s22
        %s209 = smul.u32 2, %s22
        %s210 = smul.u32 2, %s22
        %v211 = vld [vmem:[%s207] sm:$0xff]
        %v212 = vld [vmem:[%s207 + $0x8] sm:$0xff]
        %v213 = vlaneseq
        %v214 = vand.u32 %v213, 127
        %215 = vset.pattern.permute.xlu0 0
        %216 = vperm.xlu0 %215, %v211
        %v217 = vpop.permute.xlu0 %216
        %218 = vset.pattern.permute.xlu0 0
        %219 = vperm.xlu0 %218, %v212
        %v220 = vpop.permute.xlu0 %219
        %vm221 = vcmp.eq.s32.totalorder %v217, %v214
        %vm222 = vcmp.eq.s32.totalorder %v220, %v214
        %v223 = vsel %vm221, 1, 0
        %v224 = vsel %vm222, 1, 0
        %v225 = vcvt.s32.f32 %v223
        %v226 = vcvt.s32.f32 %v224
        %v227 = vld [vmem:[%s1] sm:$0xff]
        %v228 = vld [vmem:[%s1 + $0x8] sm:$0xff]
        %v229 = vld [vmem:[%s1 + $0x10] sm:$0xff]
        %v230 = vld [vmem:[%s1 + $0x18] sm:$0xff]
        %v231 = vld [vmem:[%s1 + $0x20] sm:$0xff]
        %v232 = vld [vmem:[%s1 + $0x28] sm:$0xff]
        %v233 = vld [vmem:[%s1 + $0x30] sm:$0xff]
        %v234 = vld [vmem:[%s1 + $0x38] sm:$0xff]
        %vm235 = vcmask 523264
        %v237 = vsel %vm235, %v225, 0
        %v240 = vsel %vm235, %v226, 0
        %242 = vmatprep.subr.mxu0 0.0
        %243 = vmatpush1.msra.mxu0 %v227
        %244 = vmatprep.subr.mxu0 0.0
        %245 = vmatpush1.msra.mxu0 %v228
        %246 = vmatprep.subr.mxu0 0.0
        %247 = vmatpush1.msra.mxu0 %v229
        %248 = vmatprep.subr.mxu0 0.0
        %249 = vmatpush1.msra.mxu0 %v230
        %250 = vmatprep.subr.mxu0 0.0
        %251 = vmatpush1.msra.mxu0 %v231
        %252 = vmatprep.subr.mxu0 0.0
        %253 = vmatpush1.msra.mxu0 %v232
        %254 = vmatprep.subr.mxu0 0.0
        %255 = vmatpush1.msra.mxu0 %v233
        %256 = vmatprep.subr.mxu0 0.0
        %257 = vmatpush1.msra.mxu0 %v234
        %258 = vmatprep.subr.mxu0 0.0
        %259 = vmatpush1.msra.mxu0 0.0
        %260 = vmatprep.subr.mxu0 0.0
        %261 = vmatpush1.msra.mxu0 0.0
        %262 = vmatprep.subr.mxu0 0.0
        %263 = vmatpush1.msra.mxu0 0.0
        %264 = vmatprep.subr.mxu0 0.0
        %265 = vmatpush1.msra.mxu0 0.0
        %266 = vmatprep.subr.mxu0 0.0
        %267 = vmatpush1.msra.mxu0 0.0
        %268 = vmatprep.subr.mxu0 0.0
        %269 = vmatpush1.msra.mxu0 0.0
        %270 = vmatprep.subr.mxu0 0.0
        %271 = vmatpush1.msra.mxu0 0.0
        %272 = vmatprep.subr.mxu0 0.0
        %273 = vmatpush1.msra.mxu0 0.0
        %274 = vmatprep.subr.mxu0 0.0
        %275 = vmatpush1.msra.mxu0 0.0
        %276 = vmatprep.subr.mxu0 0.0
        %277 = vmatpush1.msra.mxu0 0.0
        %278 = vmatprep.subr.mxu0 0.0
        %279 = vmatpush1.msra.mxu0 0.0
        %280 = vmatprep.subr.mxu0 0.0
        %281 = vmatpush1.msra.mxu0 0.0
        %282 = vmatprep.subr.mxu0 0.0
        %283 = vmatpush1.msra.mxu0 0.0
        %284 = vmatprep.subr.mxu0 0.0
        %285 = vmatpush1.msra.mxu0 0.0
        %286 = vmatprep.subr.mxu0 0.0
        %287 = vmatpush1.msra.mxu0 0.0
        %288 = vmatprep.subr.mxu0 0.0
        %289 = vmatpush1.msra.mxu0 0.0
        %290 = vmatprep.subr.mxu0 0.0
        %291 = vmatpush1.msra.mxu0 0.0
        %292 = vmatprep.subr.mxu0 0.0
        %293 = vmatpush1.msra.mxu0 0.0
        %294 = vmatprep.subr.mxu0 0.0
        %295 = vmatpush1.msra.mxu0 0.0
        %296 = vmatprep.subr.mxu0 0.0
        %297 = vmatpush1.msra.mxu0 0.0
        %298 = vmatprep.subr.mxu0 0.0
        %299 = vmatpush1.msra.mxu0 0.0
        %300 = vmatprep.subr.mxu0 0.0
        %301 = vmatpush1.msra.mxu0 0.0
        %302 = vmatprep.subr.mxu0 0.0
        %303 = vmatpush1.msra.mxu0 0.0
        %304 = vmatprep.subr.mxu0 0.0
        %305 = vmatpush1.msra.mxu0 0.0
        %306 = vmatprep.mubr.f32.mxu0 0.0
        %307 = vmatmul.mubr.f32.gmra.mrb[0].mxu0 %v237
        %v308 = vpop.f32.mrb[0].mxu0
        %v309 = vadd.f32 0.0, %v308
        %v310 = vpop.f32.mrb[0].mxu0
        %311 = vmatprep.mubr.f32.mxu0 0.0
        %312 = vmatmul.mubr.f32.gmra.mrb[0].mxu0 %v240
        %v313 = vpop.f32.mrb[0].mxu0
        %v314 = vadd.f32 0.0, %v313
        %v315 = vpop.f32.mrb[0].mxu0
        %316 = vdwg.mxu0
        %vm317 = vcmask 261120
        %318 = vst.msk [vmem:[%s195] sm:$0xff] %vm317, %v309
        %319 = vst.msk [vmem:[%s195 + $0x8] sm:$0xff] %vm317, %v314
        %v320 = vld [vmem:[%s2] sm:$0xff]
        %v321 = vld [vmem:[%s2 + $0x8] sm:$0xff]
        %v322 = vld [vmem:[%s2 + $0x10] sm:$0xff]
        %v323 = vld [vmem:[%s2 + $0x18] sm:$0xff]
        %v324 = vld [vmem:[%s2 + $0x20] sm:$0xff]
        %v325 = vld [vmem:[%s2 + $0x28] sm:$0xff]
        %v326 = vld [vmem:[%s2 + $0x30] sm:$0xff]
        %v327 = vld [vmem:[%s2 + $0x38] sm:$0xff]
        %328 = vmatprep.subr.mxu0 0.0
        %329 = vmatpush1.msra.mxu0 %v320
        %330 = vmatprep.subr.mxu0 0.0
        %331 = vmatpush1.msra.mxu0 %v321
        %332 = vmatprep.subr.mxu0 0.0
        %333 = vmatpush1.msra.mxu0 %v322
        %334 = vmatprep.subr.mxu0 0.0
        %335 = vmatpush1.msra.mxu0 %v323
        %336 = vmatprep.subr.mxu0 0.0
        %337 = vmatpush1.msra.mxu0 %v324
        %338 = vmatprep.subr.mxu0 0.0
        %339 = vmatpush1.msra.mxu0 %v325
        %340 = vmatprep.subr.mxu0 0.0
        %341 = vmatpush1.msra.mxu0 %v326
        %342 = vmatprep.subr.mxu0 0.0
        %343 = vmatpush1.msra.mxu0 %v327
        %344 = vmatprep.subr.mxu0 0.0
        %345 = vmatpush1.msra.mxu0 0.0
        %346 = vmatprep.subr.mxu0 0.0
        %347 = vmatpush1.msra.mxu0 0.0
        %348 = vmatprep.subr.mxu0 0.0
        %349 = vmatpush1.msra.mxu0 0.0
        %350 = vmatprep.subr.mxu0 0.0
        %351 = vmatpush1.msra.mxu0 0.0
        %352 = vmatprep.subr.mxu0 0.0
        %353 = vmatpush1.msra.mxu0 0.0
        %354 = vmatprep.subr.mxu0 0.0
        %355 = vmatpush1.msra.mxu0 0.0
        %356 = vmatprep.subr.mxu0 0.0
        %357 = vmatpush1.msra.mxu0 0.0
        %358 = vmatprep.subr.mxu0 0.0
        %359 = vmatpush1.msra.mxu0 0.0
        %360 = vmatprep.subr.mxu0 0.0
        %361 = vmatpush1.msra.mxu0 0.0
        %362 = vmatprep.subr.mxu0 0.0
        %363 = vmatpush1.msra.mxu0 0.0
        %364 = vmatprep.subr.mxu0 0.0
        %365 = vmatpush1.msra.mxu0 0.0
        %366 = vmatprep.subr.mxu0 0.0
        %367 = vmatpush1.msra.mxu0 0.0
        %368 = vmatprep.subr.mxu0 0.0
        %369 = vmatpush1.msra.mxu0 0.0
        %370 = vmatprep.subr.mxu0 0.0
        %371 = vmatpush1.msra.mxu0 0.0
        %372 = vmatprep.subr.mxu0 0.0
        %373 = vmatpush1.msra.mxu0 0.0
        %374 = vmatprep.subr.mxu0 0.0
        %375 = vmatpush1.msra.mxu0 0.0
        %376 = vmatprep.subr.mxu0 0.0
        %377 = vmatpush1.msra.mxu0 0.0
        %378 = vmatprep.subr.mxu0 0.0
        %379 = vmatpush1.msra.mxu0 0.0
        %380 = vmatprep.subr.mxu0 0.0
        %381 = vmatpush1.msra.mxu0 0.0
        %382 = vmatprep.subr.mxu0 0.0
        %383 = vmatpush1.msra.mxu0 0.0
        %384 = vmatprep.subr.mxu0 0.0
        %385 = vmatpush1.msra.mxu0 0.0
        %386 = vmatprep.subr.mxu0 0.0
        %387 = vmatpush1.msra.mxu0 0.0
        %388 = vmatprep.subr.mxu0 0.0
        %389 = vmatpush1.msra.mxu0 0.0
        %390 = vmatprep.subr.mxu0 0.0
        %391 = vmatpush1.msra.mxu0 0.0
        %392 = vmatprep.mubr.f32.mxu0 0.0
        %393 = vmatmul.mubr.f32.gmra.mrb[0].mxu0 %v237
        %v394 = vpop.f32.mrb[0].mxu0
        %v395 = vadd.f32 0.0, %v394
        %v396 = vpop.f32.mrb[0].mxu0
        %397 = vmatprep.mubr.f32.mxu0 0.0
        %398 = vmatmul.mubr.f32.gmra.mrb[0].mxu0 %v240
        %v399 = vpop.f32.mrb[0].mxu0
        %v400 = vadd.f32 0.0, %v399
        %v401 = vpop.f32.mrb[0].mxu0
        %402 = vdwg.mxu0
        %403 = vst.msk [vmem:[%s202] sm:$0xff] %vm317, %v395
        %404 = vst.msk [vmem:[%s202 + $0x8] sm:$0xff] %vm317, %v400
        %s405 = sand.u32 %s98, 1
        %s406 = scalar_lea.sflag [#allocation3], %s405
        %s407 = sand.u32 %s98, 1
        %s408 = smul.addr %s407, 16
        %s409 = scalar_lea.vmem [#allocation2], %s408
        %s410 = sand.u32 %s124, 1
        %s411 = scalar_lea.sflag [#allocation5], %s410
        %s412 = sand.u32 %s124, 1
        %s413 = smul.addr %s412, 16
        %s414 = scalar_lea.vmem [#allocation4], %s413
        // Predicated region
        $region33: #{tpu_custom_call.1} parent=31 // pred_check
          %p415 = pneg %p108
        $region34: #{tpu_custom_call.1} parent=31 // pred_check_branch
          %417 = sbr.rel (%p415) target = $region36
        $region35: #{tpu_custom_call.1} parent=31 // pred_region
          %s418 = smul.u32 2, %s22
          %s420 = ssub.s32 256, 256
          %421 = vsyncadd %s406, %s420
          %s422 = smul.addr %s418, 128
          %s423 = scalar_lea.hbm %s3, %s422
          %s424 = sshll.u32 %s409, 4
          %s425 = int_to_ptr.vmem [resolvable:$true] %s424
          %430 = dma.vmem_to_hbm [thread:$0]  %s425, 256, %s423, %s406, 128, 128, 8
        $region36: #{tpu_custom_call.1} parent=31 // pred_fallthru
          _
        // Predicated region
        $region37: #{tpu_custom_call.1} parent=31 // pred_check
          %p431 = pneg %p134
        $region38: #{tpu_custom_call.1} parent=31 // pred_check_branch
          %433 = sbr.rel (%p431) target = $region40
        $region39: #{tpu_custom_call.1} parent=31 // pred_region
          %s434 = smul.u32 2, %s22
          %s436 = ssub.s32 256, 256
          %437 = vsyncadd %s411, %s436
          %s438 = smul.addr %s434, 128
          %s439 = scalar_lea.hbm %s4, %s438
          %s440 = sshll.u32 %s414, 4
          %s441 = int_to_ptr.vmem [resolvable:$true] %s440
          %446 = dma.vmem_to_hbm [thread:$0]  %s441, 256, %s439, %s411, 128, 128, 8
        $region40: #{tpu_custom_call.1} parent=31 // pred_fallthru
          _
      $region32: #{tpu_custom_call.1} parent=5 // pred_fallthru
        _
      %p447 = scmp.le.s32.totalorder 2, %s17
      // Predicated region
      $region41: #{tpu_custom_call.1} parent=5 // pred_check
        %p448 = pneg %p447
      $region42: #{tpu_custom_call.1} parent=5 // pred_check_branch
        %450 = sbr.rel (%p448) target = $region44
      $region43: #{tpu_custom_call.1} parent=5 // pred_region
        %s451 = ssub.s32 %s17, 2
        // Predicated region
        $region45: #{tpu_custom_call.1} parent=43 // pred_check
          %p452 = pneg %p114
        $region46: #{tpu_custom_call.1} parent=43 // pred_check_branch
          %454 = sbr.rel (%p452) target = $region48
        $region47: #{tpu_custom_call.1} parent=43 // pred_region
          %s455 = sand.u32 %s99, 1
          %s456 = scalar_lea.sflag [#allocation3], %s455
          %s457 = sand.u32 %s99, 1
          %s458 = smul.addr %s457, 16
          %s459 = scalar_lea.vmem [#allocation2], %s458
          %460 = dma.done %s456, 256
        $region48: #{tpu_custom_call.1} parent=43 // pred_fallthru
          _
        // Predicated region
        $region49: #{tpu_custom_call.1} parent=43 // pred_check
          %p461 = pneg %p140
        $region50: #{tpu_custom_call.1} parent=43 // pred_check_branch
          %463 = sbr.rel (%p461) target = $region52
        $region51: #{tpu_custom_call.1} parent=43 // pred_region
          %s464 = sand.u32 %s125, 1
          %s465 = scalar_lea.sflag [#allocation5], %s464
          %s466 = sand.u32 %s125, 1
          %s467 = smul.addr %s466, 16
          %s468 = scalar_lea.vmem [#allocation4], %s467
          %469 = dma.done %s465, 256
        $region52: #{tpu_custom_call.1} parent=43 // pred_fallthru
          _
      $region44: #{tpu_custom_call.1} parent=5 // pred_fallthru
        _
    $region6: #{tpu_custom_call.1} parent=1 // loop_footer
      %s21 = sadd.s32 1, %s17
    $region7: #{tpu_custom_call.1} parent=1 // loop_footer_branch
      %16 = sbr.rel target = $region3
    $region8: #{tpu_custom_call.1} parent=1 // loop_exit
      _
    %470 = vsyncpa [#allocation3], 1
    %s471 = scalar_lea.sflag [#allocation3], 1
    %472 = vsyncpa %s471, 1
    %473 = vsyncpa [#allocation5], 1
    %s474 = scalar_lea.sflag [#allocation5], 1
    %475 = vsyncpa %s474, 1

</llo_original>
